<compile_context>
chip_gen: v5e
topology: v5e:2x2
jax: 0.10.0
libtpu: 0.0.40
codegen_flags: <defaults>
</compile_context>

<pallas_src>
import functools

import jax
import jax.numpy as jnp
from jax import lax
from jax.experimental import pallas as pl
from jax.experimental.pallas import tpu as pltpu

DECAY = 0.95
INPUT_FACTOR = 0.05
LN_EPS = 1e-5


def _mamba_stack_kernel(x_ref, w_in_ref, wB_ref, wC_ref, w_out_ref,
                        small_i_ref, small_d_ref, decay_ref, carry_ref,
                        o_ref,
                        act_ref, state_ref, pad_ref):
    """One grid step = one (batch element, layer, time-chunk) tile.

    Scratch (persists across the sequential (L, T-chunk) sweep of a batch elem):
      act_ref   [T, D]     : layer activation resident in VMEM (no HBM round-trip)
      state_ref [1, Sp]    : decayed recurrence state carried across time chunks
      pad_ref   [Tc+8, I]  : conv staging; rows 0..7 hold the previous chunk tail
    """
    l = pl.program_id(1)
    t = pl.program_id(2)
    n_layers = pl.num_programs(1)
    Tc = x_ref.shape[1]
    I = small_i_ref.shape[2]
    t0 = pl.multiple_of(t * Tc, 8)

    # Layer 0: bring this chunk of the embedded input into the resident activation.
    @pl.when(l == 0)
    def _():
        act_ref[pl.ds(t0, Tc), :] = x_ref[0]

    # Start of each layer's time sweep: reset recurrence state + conv halo
    # (matches continuous_state := zeros and Conv1d left zero-padding).
    @pl.when(t == 0)
    def _():
        state_ref[...] = jnp.zeros_like(state_ref)
        pad_ref[pl.ds(0, 8), :] = jnp.zeros((8, I), jnp.float32)

    x_in = act_ref[pl.ds(t0, Tc), :]                           # [Tc, D] f32

    # ---- in_proj: bf16 weights straight from HBM, f32 MXU accumulation -------
    xp = jnp.dot(x_in.astype(jnp.bfloat16), w_in_ref[0],
                 preferred_element_type=jnp.float32)           # [Tc, 2I]
    x_input = xp[:, :I]
    x_gate = xp[:, I:]

    # ---- causal depthwise Conv1d (k=4, left pad 3) via persistent staging ----
    # pad rows 0..7 = previous chunk's last 8 rows (zeros at t == 0);
    # rows 8..Tc+7 = current chunk.   out[j] = b + sum_k w[k] * x[j-3+k].
    pad_ref[pl.ds(8, Tc), :] = x_input                         # aligned store
    cw = small_i_ref[0]                                        # [8, I] packed
    acc = (cw[4:5, :]                                          # conv bias
           + cw[0:1, :] * pad_ref[pl.ds(5, Tc), :]
           + cw[1:2, :] * pad_ref[pl.ds(6, Tc), :]
           + cw[2:3, :] * pad_ref[pl.ds(7, Tc), :]
           + cw[3:4, :] * x_input)
    pad_ref[pl.ds(0, 8), :] = pad_ref[pl.ds(Tc, 8), :]         # halo for next chunk

    x_conv = acc * jax.nn.sigmoid(acc)                         # SiLU, f32
    gate = x_gate * jax.nn.sigmoid(x_gate)                     # SiLU(x_gate), f32

    # ---- B_proj ---------------------------------------------------------------
    u = jnp.dot(x_conv.astype(jnp.bfloat16), wB_ref[0],
                preferred_element_type=jnp.float32)            # [Tc, Sp]

    # ---- decayed recurrence as ONE lower-triangular MXU matmul ----------------
    #   h[j] = DECAY^(j+1) * h_prev + sum_{k<=j} INPUT_FACTOR * DECAY^(j-k) * u[k]
    # decay_ref / carry_ref are hoisted, grid-invariant operands (no per-step exp).
    h_all = (jnp.dot(decay_ref[...], u.astype(jnp.bfloat16),
                     preferred_element_type=jnp.float32)
             + carry_ref[...] * state_ref[...])                # [Tc, Sp] f32
    state_ref[...] = h_all[Tc - 1:Tc, :]                       # carry to next chunk

    # ---- C_proj + D*u skip, gate, out_proj ------------------------------------
    y = jnp.dot(h_all.astype(jnp.bfloat16), wC_ref[0],
                preferred_element_type=jnp.float32)            # [Tc, I]
    y = (y + cw[5:6, :] * x_conv) * gate
    y = jnp.dot(y.astype(jnp.bfloat16), w_out_ref[0],
                preferred_element_type=jnp.float32)            # [Tc, D]

    # ---- residual + LayerNorm (eps = 1e-5, affine), f32 ------------------------
    res = y + x_in
    mean = jnp.mean(res, axis=-1, keepdims=True)
    var = jnp.mean((res - mean) ** 2, axis=-1, keepdims=True)
    sd = small_d_ref[0]                                        # [8, D] packed
    out = (res - mean) * lax.rsqrt(var + LN_EPS) * sd[0:1, :] + sd[1:2, :]

    # Intermediate layers feed the next layer via VMEM only; only the last layer
    # writes the HBM output block.
    @pl.when(l < n_layers - 1)
    def _():
        act_ref[pl.ds(t0, Tc), :] = out

    @pl.when(l == n_layers - 1)
    def _():
        o_ref[0] = out


def infinite_mamba_stack(x_emb, st, *, t_chunk=256):
    """Run all InfiniteMambaCore layers over the embedded input in one pallas_call."""
    B, T, D = x_emb.shape
    L, _, two_i = st["w_in_t"].shape
    I = two_i // 2
    Sp = st["wB_t"].shape[2]
    Tc = min(t_chunk, T)
    assert T % Tc == 0 and Tc % 8 == 0, "time chunk must be a multiple of 8 dividing T"
    NT = T // Tc

    # Grid-invariant recurrence operands, hoisted out of the kernel.
    idx = jnp.arange(Tc, dtype=jnp.float32)
    diff = idx[:, None] - idx[None, :]
    decay_mat = jnp.where(diff >= 0.0,
                          INPUT_FACTOR * jnp.power(jnp.float32(DECAY), diff),
                          0.0).astype(jnp.bfloat16)            # [Tc, Tc] lower-tri
    carry = jnp.power(jnp.float32(DECAY), idx + 1.0).reshape(Tc, 1)  # [Tc, 1] f32

    def x_map(b, l, t):
        # Only layer 0 consumes x; freeze the block index at the last-fetched
        # block for l > 0 so the pipeline never re-fetches the embedding chunk.
        return (b, jnp.where(l == 0, t, NT - 1), 0)

    def w_map(b, l, t):
        return (l, 0, 0)          # weights re-DMA'd only when the layer changes

    def const_map(b, l, t):
        return (0, 0)             # fetched once

    def o_map(b, l, t):
        # Intermediate layers never write o_ref; keep the block index constant so
        # nothing stale is flushed between layers -- only the last layer advances.
        return (b, jnp.where(l == L - 1, t, 0), 0)

    in_specs = [
        pl.BlockSpec((1, Tc, D), x_map),
        pl.BlockSpec((1, D, 2 * I), w_map),   # in_proj^T   (bf16)
        pl.BlockSpec((1, I, Sp), w_map),      # B_proj^T    (bf16, lane-padded state)
        pl.BlockSpec((1, Sp, I), w_map),      # C_proj^T    (bf16)
        pl.BlockSpec((1, I, D), w_map),       # out_proj^T  (bf16)
        pl.BlockSpec((1, 8, I), w_map),       # packed conv w[0:4] / conv b / D (f32)
        pl.BlockSpec((1, 8, D), w_map),       # packed LN gamma / beta          (f32)
        pl.BlockSpec((Tc, Tc), const_map),    # decay matrix (bf16, hoisted)
        pl.BlockSpec((Tc, 1), const_map),     # carry vector (f32, hoisted)
    ]
    out_spec = pl.BlockSpec((1, Tc, D), o_map)

    scratch = [
        pltpu.VMEM((T, D), jnp.float32),       # resident activation (per batch elem)
        pltpu.VMEM((1, Sp), jnp.float32),      # recurrence state
        pltpu.VMEM((Tc + 8, I), jnp.float32),  # conv staging + halo rows
    ]

    # ---- VMEM footprint -> explicit limit --------------------------------------
    bf16_w = 2 * (D * 2 * I + I * Sp + Sp * I + I * D)
    f32_small = 4 * (8 * I + 8 * D)
    dbl_weights = 2 * (bf16_w + f32_small)               # double-buffered weights
    dbl_io = 2 * 2 * (4 * Tc * D)                        # x block + out block, x2 buf
    consts = 2 * (2 * Tc * Tc + 4 * 8 * Tc)
    scratch_bytes = 4 * (T * D + 8 * Sp + (Tc + 8) * I)
    footprint = dbl_weights + dbl_io + consts + scratch_bytes
    # Headroom, floor 32 MiB, cap 100 MiB (v5e/v6e: 128 MiB physical).  On v7x
    # (64 MiB/TC) re-derive T / Tc or keep the resident activation in bf16 if the
    # computed footprint approaches ~56 MiB.
    vmem_limit = int(min(max(int(footprint * 1.5) + (4 << 20), 32 << 20), 100 << 20))

    # Advisory cost hint for XLA scheduling around the kernel.
    matmul_flops = (2 * B * L * T * (D * 2 * I + I * Sp + Sp * I + I * D)
                    + 2 * B * L * T * Tc * Sp)
    transcendentals = B * L * T * (2 * I + 1)
    bytes_accessed = (4 * B * T * D                        # embedding read (layer 0)
                      + 4 * B * T * D                      # final-layer output write
                      + B * L * (bf16_w // 2 + f32_small // 4) * 0 + B * L * (bf16_w // 2 * 1) * 0
                      + B * L * ((bf16_w // 2) + (f32_small // 4) * 4)  # streamed weights
                      + 2 * Tc * Tc + 4 * Tc)
    cost = pl.CostEstimate(flops=int(matmul_flops),
                           transcendentals=int(transcendentals),
                           bytes_accessed=int(bytes_accessed))

    return pl.pallas_call(
        _mamba_stack_kernel,
        out_shape=jax.ShapeDtypeStruct((B, T, D), jnp.float32),
        grid_spec=pltpu.PrefetchScalarGridSpec(
            num_scalar_prefetch=0,
            grid=(B, L, NT),
            in_specs=in_specs,
            out_specs=out_spec,
            scratch_shapes=scratch,
        ),
        compiler_params=pltpu.CompilerParams(
            # Batch elements are independent -> shard across TensorCores on v7x;
            # layer and time axes carry state -> sequential.
            dimension_semantics=("parallel", "arbitrary", "arbitrary"),
            vmem_limit_bytes=vmem_limit,
        ),
        cost_estimate=cost,
    )(x_emb, st["w_in_t"], st["wB_t"], st["wC_t"], st["w_out_t"],
      st["small_i"], st["small_d"], decay_mat, carry)


def encoder_forward(tokens, params, *, t_chunk=256):
    """InfiniteMambaTextEncoder.forward for 2-D integer token input [B, T]."""
    B, T = tokens.shape
    x = params["tok_emb"][tokens] + params["pos_emb"][:T][None, :, :]  # glue gather
    return infinite_mamba_stack(x, params["stacked"], t_chunk=t_chunk)


def encoder_reference(tokens, params):
    """Pure-JAX reference mirroring the PyTorch forward (exact sequential f32 scan).

    Projection matmuls use the same bf16-weight / f32-accumulate convention as
    the kernel; the recurrence itself is an exact f32 scan, so the comparison
    also bounds the bf16 triangular-matmul drift.
    """
    st = params["stacked"]
    B, T = tokens.shape
    D = params["tok_emb"].shape[1]
    L, _, two_i = st["w_in_t"].shape
    I = two_i // 2
    Sp = st["wB_t"].shape[2]

    def mm(a, w_bf16):
        return jnp.dot(a.astype(jnp.bfloat16), w_bf16,
                       preferred_element_type=jnp.float32)

    x = params["tok_emb"][tokens] + params["pos_emb"][:T][None, :, :]
    for l in range(L):
        conv_w = st["small_i"][l, 0:4]          # [4, I]
        conv_b = st["small_i"][l, 4:5]          # [1, I]
        d_vec = st["small_i"][l, 5:6]           # [1, I]
        gamma = st["small_d"][l, 0:1]           # [1, D]
        beta = st["small_d"][l, 1:2]            # [1, D]

        xp = mm(x.reshape(B * T, D), st["w_in_t"][l]).reshape(B, T, 2 * I)
        x_input, x_gate = xp[..., :I], xp[..., I:]
        pad = jnp.pad(x_input, ((0, 0), (3, 0), (0, 0)))
        acc = conv_b
        for k in range(4):
            acc = acc + conv_w[k] * pad[:, k:k + T, :]
        x_conv = acc * jax.nn.sigmoid(acc)
        gate = x_gate * jax.nn.sigmoid(x_gate)
        u = mm(x_conv.reshape(B * T, I), st["wB_t"][l]).reshape(B, T, Sp)

        def step(h, u_t):
            h = DECAY * h + INPUT_FACTOR * u_t
            return h, h

        _, h_all = lax.scan(step, jnp.zeros((B, Sp), jnp.float32),
                            jnp.swapaxes(u, 0, 1))
        h_all = jnp.swapaxes(h_all, 0, 1)                      # [B, T, Sp]
        y = mm(h_all.reshape(B * T, Sp), st["wC_t"][l]).reshape(B, T, I)
        y = (y + d_vec * x_conv) * gate
        y = mm(y.reshape(B * T, I), st["w_out_t"][l]).reshape(B, T, D)
        res = y + x
        mean = jnp.mean(res, axis=-1, keepdims=True)
        var = jnp.mean((res - mean) ** 2, axis=-1, keepdims=True)
        x = (res - mean) * lax.rsqrt(var + LN_EPS) * gamma + beta
    return x


def init_params(vocab, embed_dim, num_layers, state_size, key):
    D = embed_dim
    I = 2 * D                                    # expand_factor = 2
    S = state_size
    Sp = max(128, ((S + 127) // 128) * 128)      # lane-dense padded state size
    keys = jax.random.split(key, 2 + num_layers)
    tok_emb = jax.random.normal(keys[0], (vocab, D), jnp.float32)
    pos_emb = jax.random.normal(keys[1], (20000, D), jnp.float32) * 0.02

    w_in, wB, wC, w_out, small_i, small_d = [], [], [], [], [], []
    for li in range(num_layers):
        k = jax.random.split(keys[2 + li], 7)
        w_in.append(jax.random.normal(k[0], (D, 2 * I), jnp.float32) / jnp.sqrt(D))
        conv_w = jax.random.normal(k[1], (4, I), jnp.float32) * 0.2
        conv_b = jax.random.normal(k[2], (1, I), jnp.float32) * 0.1
        d_vec = jax.random.normal(k[5], (1, I), jnp.float32) * 0.1
        small_i.append(jnp.concatenate(
            [conv_w, conv_b, d_vec, jnp.zeros((2, I), jnp.float32)], axis=0))  # [8, I]
        b_real = jax.random.normal(k[3], (I, S), jnp.float32) / jnp.sqrt(I)
        wB.append(jnp.pad(b_real, ((0, 0), (0, Sp - S))))       # zero lane padding
        c_real = jax.random.normal(k[4], (S, I), jnp.float32) / jnp.sqrt(S)
        wC.append(jnp.pad(c_real, ((0, Sp - S), (0, 0))))
        w_out.append(jax.random.normal(k[6], (I, D), jnp.float32) / jnp.sqrt(I))
        small_d.append(jnp.concatenate(
            [jnp.ones((1, D), jnp.float32),        # LN gamma (row 0)
             jnp.zeros((7, D), jnp.float32)],      # LN beta (row 1) + pad rows
            axis=0))                                # [8, D]

    stacked = dict(
        # Large projection weights live in bf16 in HBM; the MXU consumes them
        # directly with f32 accumulation (no per-step casts).
        w_in_t=jnp.stack(w_in).astype(jnp.bfloat16),
        wB_t=jnp.stack(wB).astype(jnp.bfloat16),
        wC_t=jnp.stack(wC).astype(jnp.bfloat16),
        w_out_t=jnp.stack(w_out).astype(jnp.bfloat16),
        small_i=jnp.stack(small_i),          # [L, 8, I] f32: conv w, conv b, D
        small_d=jnp.stack(small_d),          # [L, 8, D] f32: LN gamma, beta
    )
    return dict(tok_emb=tok_emb, pos_emb=pos_emb, stacked=stacked)


if __name__ == "__main__":
    vocab_size = 100
    embed_dim = 32      # D
    num_layers = 2      # L
    state_size = 16     # S (zero-padded to 128 lanes at init)
    B, T = 2, 16
    t_chunk = 8         # 2 time chunks -> exercises the state / conv-halo carry

    key = jax.random.PRNGKey(0)
    kp, kt = jax.random.split(key)
    params = init_params(vocab_size, embed_dim, num_layers, state_size, kp)
    tokens = jax.random.randint(kt, (B, T), 0, vocab_size, dtype=jnp.int32)

    out = jax.jit(functools.partial(encoder_forward, t_chunk=t_chunk))(tokens, params)
    out = jax.block_until_ready(out)

    ref = jax.jit(encoder_reference)(tokens, params)
    ref = jax.block_until_ready(ref)

    assert out.shape == (B, T, embed_dim)
    assert bool(jnp.all(jnp.isfinite(out)))
    max_err = float(jnp.max(jnp.abs(out - ref)))
    assert max_err < 3e-2, f"kernel/reference mismatch: max abs err = {max_err}"
    print("KERNEL_OK")
</pallas_src>

<mosaic_0001>
module attributes {stable_mosaic.version = 11 : i64} {
  func.func @_mamba_stack_kernel(%arg0: i32, %arg1: i32, %arg2: i32, %arg3: memref<1x8x32xf32, #tpu.memory_space<vmem>>, %arg4: memref<1x32x128xbf16, #tpu.memory_space<vmem>>, %arg5: memref<1x64x128xbf16, #tpu.memory_space<vmem>>, %arg6: memref<1x128x64xbf16, #tpu.memory_space<vmem>>, %arg7: memref<1x64x32xbf16, #tpu.memory_space<vmem>>, %arg8: memref<1x8x64xf32, #tpu.memory_space<vmem>>, %arg9: memref<1x8x32xf32, #tpu.memory_space<vmem>>, %arg10: memref<8x8xbf16, #tpu.memory_space<vmem>>, %arg11: memref<8x1xf32, #tpu.memory_space<vmem>>, %arg12: memref<1x8x32xf32, #tpu.memory_space<vmem>>, %arg13: memref<16x32xf32, #tpu.memory_space<vmem>>, %arg14: memref<1x128xf32, #tpu.memory_space<vmem>>, %arg15: memref<16x64xf32, #tpu.memory_space<vmem>>) attributes {dimension_semantics = [#tpu.dimension_semantics<parallel>, #tpu.dimension_semantics<arbitrary>, #tpu.dimension_semantics<arbitrary>], iteration_bounds = array<i64: 2, 2, 2>, scalar_prefetch = 0 : i64, scratch_operands = 3 : i64, tpu.core_type = #tpu.core_type<tc>, window_params = [{transform_indices = @transform_0, window_bounds = array<i64: 1, 8, 32>}, {transform_indices = @transform_1, window_bounds = array<i64: 1, 32, 128>}, {transform_indices = @transform_2, window_bounds = array<i64: 1, 64, 128>}, {transform_indices = @transform_3, window_bounds = array<i64: 1, 128, 64>}, {transform_indices = @transform_4, window_bounds = array<i64: 1, 64, 32>}, {transform_indices = @transform_5, window_bounds = array<i64: 1, 8, 64>}, {transform_indices = @transform_6, window_bounds = array<i64: 1, 8, 32>}, {pipeline_mode = #tpu.pipeline_mode<synchronous>, transform_indices = @transform_7, window_bounds = array<i64: 8, 8>}, {pipeline_mode = #tpu.pipeline_mode<synchronous>, transform_indices = @transform_8, window_bounds = array<i64: 8, 1>}, {transform_indices = @transform_9, window_bounds = array<i64: 1, 8, 32>}]} {
    %c8_i32 = arith.constant 8 : i32
    %0 = arith.muli %arg2, %c8_i32 : i32
    %1 = tpu.assume_multiple %0, 8 : i32
    %c0_i32 = arith.constant 0 : i32
    %2 = arith.cmpi eq, %arg1, %c0_i32 : i32
    %3 = arith.extui %2 : i1 to i32
    %c0_i32_0 = arith.constant 0 : i32
    %4 = arith.cmpi ne, %3, %c0_i32_0 : i32
    scf.if %4 {
      %c0_51 = arith.constant 0 : index
      %c0_52 = arith.constant 0 : index
      %c0_53 = arith.constant 0 : index
      %115 = vector.load %arg3[%c0_51, %c0_52, %c0_53] : memref<1x8x32xf32, #tpu.memory_space<vmem>>, vector<1x8x32xf32>
      %116 = vector.shape_cast %115 : vector<1x8x32xf32> to vector<8x32xf32>
      %117 = arith.index_cast %1 : i32 to index
      %c0_54 = arith.constant 0 : index
      %118 = vector.load %arg13[%117, %c0_54] : memref<16x32xf32, #tpu.memory_space<vmem>>, vector<8x32xf32>
      tpu.vector_store %arg13[%117, %c0_54], %116 {strides = array<i32>} : memref<16x32xf32, #tpu.memory_space<vmem>>, vector<8x32xf32>,
    } else {
    }
    %c0_i32_1 = arith.constant 0 : i32
    %5 = arith.cmpi eq, %arg2, %c0_i32_1 : i32
    %6 = arith.extui %5 : i1 to i32
    %c0_i32_2 = arith.constant 0 : i32
    %7 = arith.cmpi ne, %6, %c0_i32_2 : i32
    scf.if %7 {
      %cst_51 = arith.constant 0.000000e+00 : f32
      %115 = vector.broadcast %cst_51 : f32 to vector<1x128xf32>
      %c0_52 = arith.constant 0 : index
      %c0_53 = arith.constant 0 : index
      %116 = vector.load %arg14[%c0_52, %c0_53] : memref<1x128xf32, #tpu.memory_space<vmem>>, vector<1x128xf32>
      tpu.vector_store %arg14[%c0_52, %c0_53], %115 {strides = array<i32>} : memref<1x128xf32, #tpu.memory_space<vmem>>, vector<1x128xf32>,
      %cst_54 = arith.constant 0.000000e+00 : f32
      %117 = vector.broadcast %cst_54 : f32 to vector<8x64xf32>
      %c0_55 = arith.constant 0 : index
      %c0_56 = arith.constant 0 : index
      %118 = vector.load %arg15[%c0_55, %c0_56] : memref<16x64xf32, #tpu.memory_space<vmem>>, vector<8x64xf32>
      tpu.vector_store %arg15[%c0_55, %c0_56], %117 {strides = array<i32>} : memref<16x64xf32, #tpu.memory_space<vmem>>, vector<8x64xf32>,
    } else {
    }
    %8 = arith.index_cast %1 : i32 to index
    %c0 = arith.constant 0 : index
    %9 = vector.load %arg13[%8, %c0] : memref<16x32xf32, #tpu.memory_space<vmem>>, vector<8x32xf32>
    %10 = arith.truncf %9 : vector<8x32xf32> to vector<8x32xbf16>
    %c0_3 = arith.constant 0 : index
    %c0_4 = arith.constant 0 : index
    %c0_5 = arith.constant 0 : index
    %11 = vector.load %arg4[%c0_3, %c0_4, %c0_5] : memref<1x32x128xbf16, #tpu.memory_space<vmem>>, vector<1x32x128xbf16>
    %12 = vector.shape_cast %11 : vector<1x32x128xbf16> to vector<32x128xbf16>
    %cst = arith.constant dense<0.000000e+00> : vector<8x128xf32>
    %13 = tpu.matmul %10, %12, %cst {dimension_numbers = #tpu.dot_dimension_numbers<[1], [0], [0], [1], [0, 0, 1, 1], [], []>} : vector<8x32xbf16>, vector<32x128xbf16>, vector<8x128xf32> -> vector<8x128xf32>
    %14 = vector.extract_strided_slice %13 {offsets = [0, 0], sizes = [8, 64], strides = [1, 1]} : vector<8x128xf32> to vector<8x64xf32>
    %15 = vector.extract_strided_slice %13 {offsets = [0, 64], sizes = [8, 64], strides = [1, 1]} : vector<8x128xf32> to vector<8x64xf32>
    %c8 = arith.constant 8 : index
    %c0_6 = arith.constant 0 : index
    %16 = vector.load %arg15[%c8, %c0_6] : memref<16x64xf32, #tpu.memory_space<vmem>>, vector<8x64xf32>
    tpu.vector_store %arg15[%c8, %c0_6], %14 {strides = array<i32>} : memref<16x64xf32, #tpu.memory_space<vmem>>, vector<8x64xf32>,
    %c0_7 = arith.constant 0 : index
    %c0_8 = arith.constant 0 : index
    %c0_9 = arith.constant 0 : index
    %17 = vector.load %arg8[%c0_7, %c0_8, %c0_9] : memref<1x8x64xf32, #tpu.memory_space<vmem>>, vector<1x8x64xf32>
    %18 = vector.shape_cast %17 : vector<1x8x64xf32> to vector<8x64xf32>
    %19 = vector.extract_strided_slice %18 {offsets = [4, 0], sizes = [1, 64], strides = [1, 1]} : vector<8x64xf32> to vector<1x64xf32>
    %20 = vector.extract_strided_slice %18 {offsets = [0, 0], sizes = [1, 64], strides = [1, 1]} : vector<8x64xf32> to vector<1x64xf32>
    %c5 = arith.constant 5 : index
    %c0_10 = arith.constant 0 : index
    %21 = vector.load %arg15[%c5, %c0_10] : memref<16x64xf32, #tpu.memory_space<vmem>>, vector<8x64xf32>
    %22 = vector.broadcast %20 : vector<1x64xf32> to vector<8x64xf32>
    %23 = arith.mulf %22, %21 : vector<8x64xf32>
    %24 = vector.broadcast %19 : vector<1x64xf32> to vector<8x64xf32>
    %25 = arith.addf %24, %23 : vector<8x64xf32>
    %26 = vector.extract_strided_slice %18 {offsets = [1, 0], sizes = [1, 64], strides = [1, 1]} : vector<8x64xf32> to vector<1x64xf32>
    %c6 = arith.constant 6 : index
    %c0_11 = arith.constant 0 : index
    %27 = vector.load %arg15[%c6, %c0_11] : memref<16x64xf32, #tpu.memory_space<vmem>>, vector<8x64xf32>
    %28 = vector.broadcast %26 : vector<1x64xf32> to vector<8x64xf32>
    %29 = arith.mulf %28, %27 : vector<8x64xf32>
    %30 = arith.addf %25, %29 : vector<8x64xf32>
    %31 = vector.extract_strided_slice %18 {offsets = [2, 0], sizes = [1, 64], strides = [1, 1]} : vector<8x64xf32> to vector<1x64xf32>
    %c7 = arith.constant 7 : index
    %c0_12 = arith.constant 0 : index
    %32 = vector.load %arg15[%c7, %c0_12] : memref<16x64xf32, #tpu.memory_space<vmem>>, vector<8x64xf32>
    %33 = vector.broadcast %31 : vector<1x64xf32> to vector<8x64xf32>
    %34 = arith.mulf %33, %32 : vector<8x64xf32>
    %35 = arith.addf %30, %34 : vector<8x64xf32>
    %36 = vector.extract_strided_slice %18 {offsets = [3, 0], sizes = [1, 64], strides = [1, 1]} : vector<8x64xf32> to vector<1x64xf32>
    %37 = vector.broadcast %36 : vector<1x64xf32> to vector<8x64xf32>
    %38 = arith.mulf %37, %14 : vector<8x64xf32>
    %39 = arith.addf %35, %38 : vector<8x64xf32>
    %c8_13 = arith.constant 8 : index
    %c0_14 = arith.constant 0 : index
    %40 = vector.load %arg15[%c8_13, %c0_14] : memref<16x64xf32, #tpu.memory_space<vmem>>, vector<8x64xf32>
    %c0_15 = arith.constant 0 : index
    %c0_16 = arith.constant 0 : index
    %41 = vector.load %arg15[%c0_15, %c0_16] : memref<16x64xf32, #tpu.memory_space<vmem>>, vector<8x64xf32>
    tpu.vector_store %arg15[%c0_15, %c0_16], %40 {strides = array<i32>} : memref<16x64xf32, #tpu.memory_space<vmem>>, vector<8x64xf32>,
    %42 = arith.negf %39 : vector<8x64xf32>
    %43 = math.exp %42 : vector<8x64xf32>
    %cst_17 = arith.constant 1.000000e+00 : f32
    %44 = vector.broadcast %cst_17 : f32 to vector<8x64xf32>
    %45 = arith.addf %44, %43 : vector<8x64xf32>
    %46 = arith.divf %44, %45 : vector<8x64xf32>
    %47 = arith.mulf %39, %46 : vector<8x64xf32>
    %48 = arith.negf %15 : vector<8x64xf32>
    %49 = math.exp %48 : vector<8x64xf32>
    %cst_18 = arith.constant 1.000000e+00 : f32
    %50 = vector.broadcast %cst_18 : f32 to vector<8x64xf32>
    %51 = arith.addf %50, %49 : vector<8x64xf32>
    %52 = arith.divf %50, %51 : vector<8x64xf32>
    %53 = arith.mulf %15, %52 : vector<8x64xf32>
    %54 = arith.truncf %47 : vector<8x64xf32> to vector<8x64xbf16>
    %c0_19 = arith.constant 0 : index
    %c0_20 = arith.constant 0 : index
    %c0_21 = arith.constant 0 : index
    %55 = vector.load %arg5[%c0_19, %c0_20, %c0_21] : memref<1x64x128xbf16, #tpu.memory_space<vmem>>, vector<1x64x128xbf16>
    %56 = vector.shape_cast %55 : vector<1x64x128xbf16> to vector<64x128xbf16>
    %cst_22 = arith.constant dense<0.000000e+00> : vector<8x128xf32>
    %57 = tpu.matmul %54, %56, %cst_22 {dimension_numbers = #tpu.dot_dimension_numbers<[1], [0], [0], [1], [0, 0, 1, 1], [], []>} : vector<8x64xbf16>, vector<64x128xbf16>, vector<8x128xf32> -> vector<8x128xf32>
    %c0_23 = arith.constant 0 : index
    %c0_24 = arith.constant 0 : index
    %58 = vector.load %arg10[%c0_23, %c0_24] : memref<8x8xbf16, #tpu.memory_space<vmem>>, vector<8x8xbf16>
    %59 = arith.truncf %57 : vector<8x128xf32> to vector<8x128xbf16>
    %cst_25 = arith.constant dense<0.000000e+00> : vector<8x128xf32>
    %60 = tpu.matmul %58, %59, %cst_25 {dimension_numbers = #tpu.dot_dimension_numbers<[1], [0], [0], [1], [0, 0, 1, 1], [], []>} : vector<8x8xbf16>, vector<8x128xbf16>, vector<8x128xf32> -> vector<8x128xf32>
    %c0_26 = arith.constant 0 : index
    %c0_27 = arith.constant 0 : index
    %61 = vector.load %arg11[%c0_26, %c0_27] : memref<8x1xf32, #tpu.memory_space<vmem>>, vector<8x1xf32>
    %c0_28 = arith.constant 0 : index
    %c0_29 = arith.constant 0 : index
    %62 = vector.load %arg14[%c0_28, %c0_29] : memref<1x128xf32, #tpu.memory_space<vmem>>, vector<1x128xf32>
    %63 = vector.broadcast %61 : vector<8x1xf32> to vector<8x128xf32>
    %64 = vector.broadcast %62 : vector<1x128xf32> to vector<8x128xf32>
    %65 = arith.mulf %63, %64 : vector<8x128xf32>
    %66 = arith.addf %60, %65 : vector<8x128xf32>
    %67 = vector.extract_strided_slice %66 {offsets = [7, 0], sizes = [1, 128], strides = [1, 1]} : vector<8x128xf32> to vector<1x128xf32>
    %c0_30 = arith.constant 0 : index
    %c0_31 = arith.constant 0 : index
    %68 = vector.load %arg14[%c0_30, %c0_31] : memref<1x128xf32, #tpu.memory_space<vmem>>, vector<1x128xf32>
    tpu.vector_store %arg14[%c0_30, %c0_31], %67 {strides = array<i32>} : memref<1x128xf32, #tpu.memory_space<vmem>>, vector<1x128xf32>,
    %69 = arith.truncf %66 : vector<8x128xf32> to vector<8x128xbf16>
    %c0_32 = arith.constant 0 : index
    %c0_33 = arith.constant 0 : index
    %c0_34 = arith.constant 0 : index
    %70 = vector.load %arg6[%c0_32, %c0_33, %c0_34] : memref<1x128x64xbf16, #tpu.memory_space<vmem>>, vector<1x128x64xbf16>
    %71 = vector.shape_cast %70 : vector<1x128x64xbf16> to vector<128x64xbf16>
    %cst_35 = arith.constant dense<0.000000e+00> : vector<8x64xf32>
    %72 = tpu.matmul %69, %71, %cst_35 {dimension_numbers = #tpu.dot_dimension_numbers<[1], [0], [0], [1], [0, 0, 1, 1], [], []>} : vector<8x128xbf16>, vector<128x64xbf16>, vector<8x64xf32> -> vector<8x64xf32>
    %73 = vector.extract_strided_slice %18 {offsets = [5, 0], sizes = [1, 64], strides = [1, 1]} : vector<8x64xf32> to vector<1x64xf32>
    %74 = vector.broadcast %73 : vector<1x64xf32> to vector<8x64xf32>
    %75 = arith.mulf %74, %47 : vector<8x64xf32>
    %76 = arith.addf %72, %75 : vector<8x64xf32>
    %77 = arith.mulf %76, %53 : vector<8x64xf32>
    %78 = arith.truncf %77 : vector<8x64xf32> to vector<8x64xbf16>
    %c0_36 = arith.constant 0 : index
    %c0_37 = arith.constant 0 : index
    %c0_38 = arith.constant 0 : index
    %79 = vector.load %arg7[%c0_36, %c0_37, %c0_38] : memref<1x64x32xbf16, #tpu.memory_space<vmem>>, vector<1x64x32xbf16>
    %80 = vector.shape_cast %79 : vector<1x64x32xbf16> to vector<64x32xbf16>
    %cst_39 = arith.constant dense<0.000000e+00> : vector<8x32xf32>
    %81 = tpu.matmul %78, %80, %cst_39 {dimension_numbers = #tpu.dot_dimension_numbers<[1], [0], [0], [1], [0, 0, 1, 1], [], []>} : vector<8x64xbf16>, vector<64x32xbf16>, vector<8x32xf32> -> vector<8x32xf32>
    %82 = arith.addf %81, %9 : vector<8x32xf32>
    %cst_40 = arith.constant dense<0.000000e+00> : vector<8xf32>
    %83 = vector.multi_reduction <add>, %82, %cst_40 [1] : vector<8x32xf32> to vector<8xf32>
    %84 = vector.shape_cast %83 : vector<8xf32> to vector<8x1xf32>
    %cst_41 = arith.constant 3.200000e+01 : f32
    %85 = vector.broadcast %cst_41 : f32 to vector<8x1xf32>
    %86 = arith.divf %84, %85 : vector<8x1xf32>
    %87 = vector.broadcast %86 : vector<8x1xf32> to vector<8x32xf32>
    %88 = arith.subf %82, %87 : vector<8x32xf32>
    %89 = arith.mulf %88, %88 : vector<8x32xf32>
    %cst_42 = arith.constant dense<0.000000e+00> : vector<8xf32>
    %90 = vector.multi_reduction <add>, %89, %cst_42 [1] : vector<8x32xf32> to vector<8xf32>
    %91 = vector.shape_cast %90 : vector<8xf32> to vector<8x1xf32>
    %cst_43 = arith.constant 3.200000e+01 : f32
    %92 = vector.broadcast %cst_43 : f32 to vector<8x1xf32>
    %93 = arith.divf %91, %92 : vector<8x1xf32>
    %c0_44 = arith.constant 0 : index
    %c0_45 = arith.constant 0 : index
    %c0_46 = arith.constant 0 : index
    %94 = vector.load %arg9[%c0_44, %c0_45, %c0_46] : memref<1x8x32xf32, #tpu.memory_space<vmem>>, vector<1x8x32xf32>
    %95 = vector.shape_cast %94 : vector<1x8x32xf32> to vector<8x32xf32>
    %96 = vector.broadcast %86 : vector<8x1xf32> to vector<8x32xf32>
    %97 = arith.subf %82, %96 : vector<8x32xf32>
    %cst_47 = arith.constant 9.99999974E-6 : f32
    %98 = vector.broadcast %cst_47 : f32 to vector<8x1xf32>
    %99 = arith.addf %93, %98 : vector<8x1xf32>
    %100 = math.rsqrt %99 : vector<8x1xf32>
    %101 = vector.broadcast %100 : vector<8x1xf32> to vector<8x32xf32>
    %102 = arith.mulf %97, %101 : vector<8x32xf32>
    %103 = vector.extract_strided_slice %95 {offsets = [0, 0], sizes = [1, 32], strides = [1, 1]} : vector<8x32xf32> to vector<1x32xf32>
    %104 = vector.broadcast %103 : vector<1x32xf32> to vector<8x32xf32>
    %105 = arith.mulf %102, %104 : vector<8x32xf32>
    %106 = vector.extract_strided_slice %95 {offsets = [1, 0], sizes = [1, 32], strides = [1, 1]} : vector<8x32xf32> to vector<1x32xf32>
    %107 = vector.broadcast %106 : vector<1x32xf32> to vector<8x32xf32>
    %108 = arith.addf %105, %107 : vector<8x32xf32>
    %c1_i32 = arith.constant 1 : i32
    %109 = arith.cmpi slt, %arg1, %c1_i32 : i32
    %110 = arith.extui %109 : i1 to i32
    %c0_i32_48 = arith.constant 0 : i32
    %111 = arith.cmpi ne, %110, %c0_i32_48 : i32
    scf.if %111 {
      %115 = arith.index_cast %1 : i32 to index
      %c0_51 = arith.constant 0 : index
      %116 = vector.load %arg13[%115, %c0_51] : memref<16x32xf32, #tpu.memory_space<vmem>>, vector<8x32xf32>
      tpu.vector_store %arg13[%115, %c0_51], %108 {strides = array<i32>} : memref<16x32xf32, #tpu.memory_space<vmem>>, vector<8x32xf32>,
    } else {
    }
    %c1_i32_49 = arith.constant 1 : i32
    %112 = arith.cmpi eq, %arg1, %c1_i32_49 : i32
    %113 = arith.extui %112 : i1 to i32
    %c0_i32_50 = arith.constant 0 : i32
    %114 = arith.cmpi ne, %113, %c0_i32_50 : i32
    scf.if %114 {
      %c0_51 = arith.constant 0 : index
      %c0_52 = arith.constant 0 : index
      %c0_53 = arith.constant 0 : index
      %115 = vector.load %arg12[%c0_51, %c0_52, %c0_53] : memref<1x8x32xf32, #tpu.memory_space<vmem>>, vector<1x8x32xf32>
      %116 = vector.shape_cast %115 : vector<1x8x32xf32> to vector<8x32xf32>
      %117 = vector.shape_cast %108 : vector<8x32xf32> to vector<1x8x32xf32>
      tpu.vector_store %arg12[%c0_51, %c0_52, %c0_53], %117 {strides = array<i32>} : memref<1x8x32xf32, #tpu.memory_space<vmem>>, vector<1x8x32xf32>,
    } else {
    }
    return
  }
  func.func @transform_0(%arg0: i32, %arg1: i32, %arg2: i32) -> (i32, i32, i32) {
    %c0_i32 = arith.constant 0 : i32
    %0 = arith.cmpi eq, %arg1, %c0_i32 : i32
    %c1_i32 = arith.constant 1 : i32
    %1 = arith.select %0, %arg2, %c1_i32 : i32
    %c0_i32_0 = arith.constant 0 : i32
    %c0_i32_1 = arith.constant 0 : i32
    return %arg0, %1, %c0_i32_0 : i32, i32, i32
  }
  func.func @transform_1(%arg0: i32, %arg1: i32, %arg2: i32) -> (i32, i32, i32) {
    %c0_i32 = arith.constant 0 : i32
    %c0_i32_0 = arith.constant 0 : i32
    %c0_i32_1 = arith.constant 0 : i32
    return %arg1, %c0_i32, %c0_i32_0 : i32, i32, i32
  }
  func.func @transform_2(%arg0: i32, %arg1: i32, %arg2: i32) -> (i32, i32, i32) {
    %c0_i32 = arith.constant 0 : i32
    %c0_i32_0 = arith.constant 0 : i32
    %c0_i32_1 = arith.constant 0 : i32
    return %arg1, %c0_i32, %c0_i32_0 : i32, i32, i32
  }
  func.func @transform_3(%arg0: i32, %arg1: i32, %arg2: i32) -> (i32, i32, i32) {
    %c0_i32 = arith.constant 0 : i32
    %c0_i32_0 = arith.constant 0 : i32
    %c0_i32_1 = arith.constant 0 : i32
    return %arg1, %c0_i32, %c0_i32_0 : i32, i32, i32
  }
  func.func @transform_4(%arg0: i32, %arg1: i32, %arg2: i32) -> (i32, i32, i32) {
    %c0_i32 = arith.constant 0 : i32
    %c0_i32_0 = arith.constant 0 : i32
    %c0_i32_1 = arith.constant 0 : i32
    return %arg1, %c0_i32, %c0_i32_0 : i32, i32, i32
  }
  func.func @transform_5(%arg0: i32, %arg1: i32, %arg2: i32) -> (i32, i32, i32) {
    %c0_i32 = arith.constant 0 : i32
    %c0_i32_0 = arith.constant 0 : i32
    %c0_i32_1 = arith.constant 0 : i32
    return %arg1, %c0_i32, %c0_i32_0 : i32, i32, i32
  }
  func.func @transform_6(%arg0: i32, %arg1: i32, %arg2: i32) -> (i32, i32, i32) {
    %c0_i32 = arith.constant 0 : i32
    %c0_i32_0 = arith.constant 0 : i32
    %c0_i32_1 = arith.constant 0 : i32
    return %arg1, %c0_i32, %c0_i32_0 : i32, i32, i32
  }
  func.func @transform_7(%arg0: i32, %arg1: i32, %arg2: i32) -> (i32, i32) {
    %c0_i32 = arith.constant 0 : i32
    %c0_i32_0 = arith.constant 0 : i32
    %c0_i32_1 = arith.constant 0 : i32
    return %c0_i32, %c0_i32_0 : i32, i32
  }
  func.func @transform_8(%arg0: i32, %arg1: i32, %arg2: i32) -> (i32, i32) {
    %c0_i32 = arith.constant 0 : i32
    %c0_i32_0 = arith.constant 0 : i32
    %c0_i32_1 = arith.constant 0 : i32
    return %c0_i32, %c0_i32_0 : i32, i32
  }
  func.func @transform_9(%arg0: i32, %arg1: i32, %arg2: i32) -> (i32, i32, i32) {
    %c1_i32 = arith.constant 1 : i32
    %0 = arith.cmpi eq, %arg1, %c1_i32 : i32
    %c0_i32 = arith.constant 0 : i32
    %1 = arith.select %0, %arg2, %c0_i32 : i32
    %c0_i32_0 = arith.constant 0 : i32
    %c0_i32_1 = arith.constant 0 : i32
    return %arg0, %1, %c0_i32_0 : i32, i32, i32
  }
}

</mosaic_0001>

<llo_original>
// kernel: encoder_forward.1
$region0: #{encoder_forward.1}
  #allocation0 [shape = 'u32[]', space=smem, size = 0x4, offset = 0x4, fixed_abs, tag = 'smem constant byte address 0x4 - core index']
  #allocation1 [shape = 'u32[72,128]{1,0:T(1,128)}', space=vmem, size = 0x9000, scoped, tag = 'internal scratch']
  #allocation2 [shape = 'f32[16,32]{1,0:T(8,128)}', space=vmem, size = 0x2000, scoped, tag = 'scratch operand']
  #allocation3 [shape = 'f32[1,128]{1,0:T(1,128)}', space=vmem, size = 0x200, scoped, tag = 'scratch operand']
  #allocation4 [shape = 'f32[16,64]{1,0:T(8,128)}', space=vmem, size = 0x2000, scoped, tag = 'scratch operand']
  %s0 = inlined_call_operand.vmem [shape: f32[2,16,32], index: 0, kind: input, shape index: {}]
  %s1 = inlined_call_operand.hbm [shape: bf16[2,32,128], index: 1, kind: input, shape index: {}]
  %s2 = inlined_call_operand.hbm [shape: bf16[2,64,128], index: 2, kind: input, shape index: {}]
  %s3 = inlined_call_operand.vmem [shape: bf16[2,128,64], index: 3, kind: input, shape index: {}]
  %s4 = inlined_call_operand.vmem [shape: bf16[2,64,32], index: 4, kind: input, shape index: {}]
  %s5 = inlined_call_operand.hbm [shape: f32[2,8,64], index: 5, kind: input, shape index: {}]
  %s6 = inlined_call_operand.hbm [shape: f32[2,8,32], index: 6, kind: input, shape index: {}]
  %s7 = inlined_call_operand.vmem [shape: bf16[8,8], index: 7, kind: input, shape index: {}]
  %s8 = inlined_call_operand.vmem [shape: f32[8,1], index: 8, kind: input, shape index: {}]
  %s9 = inlined_call_operand.hbm [shape: f32[2,16,32], index: 9, kind: output, shape index: {}]
  %s10 = sld [smem:[#allocation0]]
  $region101: #{encoder_forward.1} parent=0
    _
  %s12 = ssub.s32 1, %s10
  %s13 = scalar_select 0, %s12, %s10
  $region1: #{encoder_forward.1} parent=0
    #allocation5 [shape = 'u8[16384]{0}', space=vmem, size = 0x4000, scoped, tag = 'input window, operand 1']
    #allocation6 [shape = 's32[2]{0}', space=sflag, size = 0x8, scoped, tag = 'scoped memory for encoder_forward.1']
    #allocation7 [shape = 's32[2]{0}', space=sflag, size = 0x8, scoped, tag = 'scoped memory for encoder_forward.1']
    #allocation8 [shape = 'u8[32768]{0}', space=vmem, size = 0x8000, scoped, tag = 'input window, operand 2']
    #allocation9 [shape = 's32[2]{0}', space=sflag, size = 0x8, scoped, tag = 'scoped memory for encoder_forward.1']
    #allocation10 [shape = 'u8[8192]{0}', space=vmem, size = 0x2000, scoped, tag = 'input window, operand 5']
    #allocation11 [shape = 'u8[8192]{0}', space=vmem, size = 0x2000, scoped, tag = 'input window, operand 6']
    #allocation12 [shape = 's32[2]{0}', space=sflag, size = 0x8, scoped, tag = 'scoped memory for encoder_forward.1']
    #allocation13 [shape = 'u8[8192]{0}', space=vmem, size = 0x2000, scoped, tag = 'output window, operand 0']
    %14 = vsyncpa [#allocation6], 0
    %s15 = scalar_lea.sflag [#allocation6], 1
    %16 = vsyncpa %s15, 0
    %17 = vsyncpa [#allocation9], 0
    %s18 = scalar_lea.sflag [#allocation9], 1
    %19 = vsyncpa %s18, 0
    %20 = vsyncpa [#allocation12], 0
    %s21 = scalar_lea.sflag [#allocation12], 1
    %22 = vsyncpa %s21, 0
    %23 = vsyncpa [#allocation7], 0
    %s24 = scalar_lea.sflag [#allocation7], 1
    %25 = vsyncpa %s24, 0
    loop: start=0, step=1, limit=10
    $region2: #{encoder_forward.1} parent=1 // loop_pre_header
      _
    $region3: #{encoder_forward.1} parent=1 // loop_header
      %s27 = sphi 0, %s31
      %p28 = scmp.ge.s32.totalorder %s27, 10
      %s34 = sphi 0, %s53
      %s35 = sphi 0, %s49
      %s36 = sphi 0, %s45
      %s37 = sphi 0, %s34
      %s38 = sphi 0, %s35
      %s39 = sphi 0, %s36
      %s40 = sphi 0, %s37
      %s41 = sphi 0, %s38
      %s42 = sphi 0, %s39
      %s62 = sphi 0, %s64
      %s65 = sphi 0, %s62
      %s66 = sphi 0, %s65
      %s82 = sphi 0, %s66
      %s88 = sphi 0, %s90
      %s91 = sphi 0, %s88
      %s92 = sphi 0, %s91
      %s108 = sphi 0, %s92
      %s114 = sphi 0, %s116
      %s117 = sphi 0, %s114
      %s118 = sphi 0, %s117
      %s134 = sphi 0, %s118
      %s140 = sphi 0, %s142
      %s143 = sphi 0, %s140
      %s144 = sphi 0, %s143
      %s160 = sphi 0, %s144
      %s166 = sphi 0, %s168
      %s169 = sphi 0, %s166
      %s170 = sphi 0, %s169
      %s186 = sphi 0, %s170
      %s192 = sphi 0, %s194
      %s195 = sphi 0, %s192
      %s196 = sphi 0, %s195
      %s212 = sphi 0, %s196
      %s218 = sphi 0, %s220
      %s221 = sphi 0, %s218
      %s222 = sphi 0, %s221
      %s238 = sphi 0, %s222
      %s242 = sphi 0, %s242
      %s244 = sphi 0, %s242
      %s245 = sphi 0, %s244
      %s259 = sphi 0, %s245
      %s263 = sphi 0, %s263
      %s265 = sphi 0, %s263
      %s266 = sphi 0, %s265
      %s280 = sphi 0, %s266
      %s292 = sphi 0, %s294
      %s295 = sphi 0, %s292
      %s296 = sphi 0, %s295
      %s312 = sphi 0, %s296
    $region4: #{encoder_forward.1} parent=1 // loop_header_branch
      %30 = sbr.rel (%p28) target = $region8
    $region5: #{encoder_forward.1} parent=1 // loop_body
      %s32 = ssub.s32 %s27, 1
      %s33 = ssub.s32 %s27, 2
      %s43 = sadd.s32 1, %s36
      %p44 = scmp.ge.s32.totalorder %s43, 2
      %s45 = scalar_select %p44, 0, %s43
      %s46 = sadd.s32 1, %s35
      %s47 = scalar_select %p44, %s46, %s35
      %p48 = scmp.ge.s32.totalorder %s47, 2
      %s49 = scalar_select %p48, 0, %s47
      %s50 = sadd.s32 1, %s34
      %s51 = scalar_select %p48, %s50, %s34
      %p52 = scmp.ge.s32.totalorder %s51, 2
      %s53 = scalar_select %p52, 0, %s51
      %p54 = scmp.eq.s32.totalorder %s35, 0
      %s55 = scalar_select %p54, %s36, 1
      %p56 = scmp.eq.s32.totalorder %s49, 0
      %s57 = scalar_select %p56, %s45, 1
      %s58 = ssub.s32 %s34, %s53
      %s59 = ssub.s32 %s55, %s57
      %s60 = sor.u32 %s58, %s59
      %p61 = scmp.eq.s32.totalorder %s60, 0
      %s63 = sadd.s32 %s62, 1
      %s64 = scalar_select %p61, %s62, %s63
      %p67 = pneg %p61
      %p68 = scmp.eq.s32.totalorder %s27, 7
      %p69 = por %p67, %p68
      %p70 = scmp.ne.s32.totalorder %s62, %s65
      %p71 = scmp.eq.s32.totalorder %s27, 0
      %p72 = por %p70, %p71
      %p73 = scmp.ne.s32.totalorder %s62, %s65
      %p74 = scmp.eq.s32.totalorder %s32, 7
      %p75 = por %p73, %p74
      %p76 = scmp.ne.s32.totalorder %s65, %s66
      %p77 = scmp.eq.s32.totalorder %s32, 0
      %p78 = por %p76, %p77
      %p79 = scmp.ne.s32.totalorder %s65, %s66
      %p80 = scmp.eq.s32.totalorder %s33, 7
      %p81 = por %p79, %p80
      %p83 = scmp.ne.s32.totalorder %s66, %s82
      %p84 = scmp.eq.s32.totalorder %s33, 0
      %p85 = por %p83, %p84
      %s86 = ssub.s32 %s35, %s49
      %p87 = scmp.eq.s32.totalorder %s86, 0
      %s89 = sadd.s32 %s88, 1
      %s90 = scalar_select %p87, %s88, %s89
      %p93 = pneg %p87
      %p94 = scmp.eq.s32.totalorder %s27, 7
      %p95 = por %p93, %p94
      %p96 = scmp.ne.s32.totalorder %s88, %s91
      %p97 = scmp.eq.s32.totalorder %s27, 0
      %p98 = por %p96, %p97
      %p99 = scmp.ne.s32.totalorder %s88, %s91
      %p100 = scmp.eq.s32.totalorder %s32, 7
      %p101 = por %p99, %p100
      %p102 = scmp.ne.s32.totalorder %s91, %s92
      %p103 = scmp.eq.s32.totalorder %s32, 0
      %p104 = por %p102, %p103
      %p105 = scmp.ne.s32.totalorder %s91, %s92
      %p106 = scmp.eq.s32.totalorder %s33, 7
      %p107 = por %p105, %p106
      %p109 = scmp.ne.s32.totalorder %s92, %s108
      %p110 = scmp.eq.s32.totalorder %s33, 0
      %p111 = por %p109, %p110
      %s112 = ssub.s32 %s35, %s49
      %p113 = scmp.eq.s32.totalorder %s112, 0
      %s115 = sadd.s32 %s114, 1
      %s116 = scalar_select %p113, %s114, %s115
      %p119 = pneg %p113
      %p120 = scmp.eq.s32.totalorder %s27, 7
      %p121 = por %p119, %p120
      %p122 = scmp.ne.s32.totalorder %s114, %s117
      %p123 = scmp.eq.s32.totalorder %s27, 0
      %p124 = por %p122, %p123
      %p125 = scmp.ne.s32.totalorder %s114, %s117
      %p126 = scmp.eq.s32.totalorder %s32, 7
      %p127 = por %p125, %p126
      %p128 = scmp.ne.s32.totalorder %s117, %s118
      %p129 = scmp.eq.s32.totalorder %s32, 0
      %p130 = por %p128, %p129
      %p131 = scmp.ne.s32.totalorder %s117, %s118
      %p132 = scmp.eq.s32.totalorder %s33, 7
      %p133 = por %p131, %p132
      %p135 = scmp.ne.s32.totalorder %s118, %s134
      %p136 = scmp.eq.s32.totalorder %s33, 0
      %p137 = por %p135, %p136
      %s138 = ssub.s32 %s35, %s49
      %p139 = scmp.eq.s32.totalorder %s138, 0
      %s141 = sadd.s32 %s140, 1
      %s142 = scalar_select %p139, %s140, %s141
      %p145 = pneg %p139
      %p146 = scmp.eq.s32.totalorder %s27, 7
      %p147 = por %p145, %p146
      %p148 = scmp.ne.s32.totalorder %s140, %s143
      %p149 = scmp.eq.s32.totalorder %s27, 0
      %p150 = por %p148, %p149
      %p151 = scmp.ne.s32.totalorder %s140, %s143
      %p152 = scmp.eq.s32.totalorder %s32, 7
      %p153 = por %p151, %p152
      %p154 = scmp.ne.s32.totalorder %s143, %s144
      %p155 = scmp.eq.s32.totalorder %s32, 0
      %p156 = por %p154, %p155
      %p157 = scmp.ne.s32.totalorder %s143, %s144
      %p158 = scmp.eq.s32.totalorder %s33, 7
      %p159 = por %p157, %p158
      %p161 = scmp.ne.s32.totalorder %s144, %s160
      %p162 = scmp.eq.s32.totalorder %s33, 0
      %p163 = por %p161, %p162
      %s164 = ssub.s32 %s35, %s49
      %p165 = scmp.eq.s32.totalorder %s164, 0
      %s167 = sadd.s32 %s166, 1
      %s168 = scalar_select %p165, %s166, %s167
      %p171 = pneg %p165
      %p172 = scmp.eq.s32.totalorder %s27, 7
      %p173 = por %p171, %p172
      %p174 = scmp.ne.s32.totalorder %s166, %s169
      %p175 = scmp.eq.s32.totalorder %s27, 0
      %p176 = por %p174, %p175
      %p177 = scmp.ne.s32.totalorder %s166, %s169
      %p178 = scmp.eq.s32.totalorder %s32, 7
      %p179 = por %p177, %p178
      %p180 = scmp.ne.s32.totalorder %s169, %s170
      %p181 = scmp.eq.s32.totalorder %s32, 0
      %p182 = por %p180, %p181
      %p183 = scmp.ne.s32.totalorder %s169, %s170
      %p184 = scmp.eq.s32.totalorder %s33, 7
      %p185 = por %p183, %p184
      %p187 = scmp.ne.s32.totalorder %s170, %s186
      %p188 = scmp.eq.s32.totalorder %s33, 0
      %p189 = por %p187, %p188
      %s190 = ssub.s32 %s35, %s49
      %p191 = scmp.eq.s32.totalorder %s190, 0
      %s193 = sadd.s32 %s192, 1
      %s194 = scalar_select %p191, %s192, %s193
      %p197 = pneg %p191
      %p198 = scmp.eq.s32.totalorder %s27, 7
      %p199 = por %p197, %p198
      %p200 = scmp.ne.s32.totalorder %s192, %s195
      %p201 = scmp.eq.s32.totalorder %s27, 0
      %p202 = por %p200, %p201
      %p203 = scmp.ne.s32.totalorder %s192, %s195
      %p204 = scmp.eq.s32.totalorder %s32, 7
      %p205 = por %p203, %p204
      %p206 = scmp.ne.s32.totalorder %s195, %s196
      %p207 = scmp.eq.s32.totalorder %s32, 0
      %p208 = por %p206, %p207
      %p209 = scmp.ne.s32.totalorder %s195, %s196
      %p210 = scmp.eq.s32.totalorder %s33, 7
      %p211 = por %p209, %p210
      %p213 = scmp.ne.s32.totalorder %s196, %s212
      %p214 = scmp.eq.s32.totalorder %s33, 0
      %p215 = por %p213, %p214
      %s216 = ssub.s32 %s35, %s49
      %p217 = scmp.eq.s32.totalorder %s216, 0
      %s219 = sadd.s32 %s218, 1
      %s220 = scalar_select %p217, %s218, %s219
      %p223 = pneg %p217
      %p224 = scmp.eq.s32.totalorder %s27, 7
      %p225 = por %p223, %p224
      %p226 = scmp.ne.s32.totalorder %s218, %s221
      %p227 = scmp.eq.s32.totalorder %s27, 0
      %p228 = por %p226, %p227
      %p229 = scmp.ne.s32.totalorder %s218, %s221
      %p230 = scmp.eq.s32.totalorder %s32, 7
      %p231 = por %p229, %p230
      %p232 = scmp.ne.s32.totalorder %s221, %s222
      %p233 = scmp.eq.s32.totalorder %s32, 0
      %p234 = por %p232, %p233
      %p235 = scmp.ne.s32.totalorder %s221, %s222
      %p236 = scmp.eq.s32.totalorder %s33, 7
      %p237 = por %p235, %p236
      %p239 = scmp.ne.s32.totalorder %s222, %s238
      %p240 = scmp.eq.s32.totalorder %s33, 0
      %p241 = por %p239, %p240
      %s243 = sadd.s32 %s242, 1
      %p246 = scmp.eq.s32.totalorder %s27, 7
      %p247 = scmp.ne.s32.totalorder %s242, %s244
      %p248 = scmp.eq.s32.totalorder %s27, 0
      %p249 = por %p247, %p248
      %p250 = scmp.ne.s32.totalorder %s242, %s244
      %p251 = scmp.eq.s32.totalorder %s32, 7
      %p252 = por %p250, %p251
      %p253 = scmp.ne.s32.totalorder %s244, %s245
      %p254 = scmp.eq.s32.totalorder %s32, 0
      %p255 = por %p253, %p254
      %p256 = scmp.ne.s32.totalorder %s244, %s245
      %p257 = scmp.eq.s32.totalorder %s33, 7
      %p258 = por %p256, %p257
      %p260 = scmp.ne.s32.totalorder %s245, %s259
      %p261 = scmp.eq.s32.totalorder %s33, 0
      %p262 = por %p260, %p261
      %s264 = sadd.s32 %s263, 1
      %p267 = scmp.eq.s32.totalorder %s27, 7
      %p268 = scmp.ne.s32.totalorder %s263, %s265
      %p269 = scmp.eq.s32.totalorder %s27, 0
      %p270 = por %p268, %p269
      %p271 = scmp.ne.s32.totalorder %s263, %s265
      %p272 = scmp.eq.s32.totalorder %s32, 7
      %p273 = por %p271, %p272
      %p274 = scmp.ne.s32.totalorder %s265, %s266
      %p275 = scmp.eq.s32.totalorder %s32, 0
      %p276 = por %p274, %p275
      %p277 = scmp.ne.s32.totalorder %s265, %s266
      %p278 = scmp.eq.s32.totalorder %s33, 7
      %p279 = por %p277, %p278
      %p281 = scmp.ne.s32.totalorder %s266, %s280
      %p282 = scmp.eq.s32.totalorder %s33, 0
      %p283 = por %p281, %p282
      %p284 = scmp.eq.s32.totalorder %s35, 1
      %s285 = scalar_select %p284, %s36, 0
      %p286 = scmp.eq.s32.totalorder %s49, 1
      %s287 = scalar_select %p286, %s45, 0
      %s288 = ssub.s32 %s34, %s53
      %s289 = ssub.s32 %s285, %s287
      %s290 = sor.u32 %s288, %s289
      %p291 = scmp.eq.s32.totalorder %s290, 0
      %s293 = sadd.s32 %s292, 1
      %s294 = scalar_select %p291, %s292, %s293
      %p297 = pneg %p291
      %p298 = scmp.eq.s32.totalorder %s27, 7
      %p299 = por %p297, %p298
      %p300 = scmp.ne.s32.totalorder %s292, %s295
      %p301 = scmp.eq.s32.totalorder %s27, 0
      %p302 = por %p300, %p301
      %p303 = scmp.ne.s32.totalorder %s292, %s295
      %p304 = scmp.eq.s32.totalorder %s32, 7
      %p305 = por %p303, %p304
      %p306 = scmp.ne.s32.totalorder %s295, %s296
      %p307 = scmp.eq.s32.totalorder %s32, 0
      %p308 = por %p306, %p307
      %p309 = scmp.ne.s32.totalorder %s295, %s296
      %p310 = scmp.eq.s32.totalorder %s33, 7
      %p311 = por %p309, %p310
      %p313 = scmp.ne.s32.totalorder %s296, %s312
      %p314 = scmp.eq.s32.totalorder %s33, 0
      %p315 = por %p313, %p314
      %p316 = scmp.le.s32.totalorder 1, %s27
      %p317 = scmp.lt.s32.totalorder %s27, 9
      %p318 = pnand %p316, %p317
      %p319 = pneg %p318
      // Predicated region
      $region9: #{encoder_forward.1} parent=5 // pred_check
        _
      $region10: #{encoder_forward.1} parent=5 // pred_check_branch
        %321 = sbr.rel (%p318) target = $region12
      $region11: #{encoder_forward.1} parent=5 // pred_region
        %s322 = ssub.s32 %s27, 1
        // Predicated region
        $region13: #{encoder_forward.1} parent=11 // pred_check
          %p323 = pneg %p255
        $region14: #{encoder_forward.1} parent=11 // pred_check_branch
          %325 = sbr.rel (%p323) target = $region16
        $region15: #{encoder_forward.1} parent=11 // pred_region
          _
        $region16: #{encoder_forward.1} parent=11 // pred_fallthru
          _
        // Predicated region
        $region17: #{encoder_forward.1} parent=11 // pred_check
          %p326 = pneg %p276
        $region18: #{encoder_forward.1} parent=11 // pred_check_branch
          %328 = sbr.rel (%p326) target = $region20
        $region19: #{encoder_forward.1} parent=11 // pred_region
          _
        $region20: #{encoder_forward.1} parent=11 // pred_fallthru
          _
      $region12: #{encoder_forward.1} parent=5 // pred_fallthru
        _
      %p329 = scmp.lt.s32.totalorder %s27, 8
      // Predicated region
      $region21: #{encoder_forward.1} parent=5 // pred_check
        %p330 = pneg %p329
      $region22: #{encoder_forward.1} parent=5 // pred_check_branch
        %332 = sbr.rel (%p330) target = $region24
      $region23: #{encoder_forward.1} parent=5 // pred_region
        // Predicated region
        $region25: #{encoder_forward.1} parent=23 // pred_check
          %p333 = pneg %p72
        $region26: #{encoder_forward.1} parent=23 // pred_check_branch
          %335 = sbr.rel (%p333) target = $region28
        $region27: #{encoder_forward.1} parent=23 // pred_region
          %p336 = scmp.eq.s32.totalorder %s35, 0
          %s337 = scalar_select %p336, %s36, 1
          %p338 = scmp.lt.s32.totalorder %s34, 1
          %s339 = scalar_select %p338, %s34, 1
          %p340 = scmp.lt.s32.totalorder %s337, 1
          %s341 = scalar_select %p340, %s337, 1
          %s342 = smul.addr %s339, 2
          %s343 = sadd.s32 %s341, %s342
          %s344 = smul.addr %s343, 8
          %s345 = scalar_lea.vmem %s0, %s344
          %p346 = scmp.eq.s32.totalorder %s35, 0
          %s347 = scalar_select %p346, %s36, 1
        $region28: #{encoder_forward.1} parent=23 // pred_fallthru
          _
        // Predicated region
        $region29: #{encoder_forward.1} parent=23 // pred_check
          %p348 = pneg %p98
        $region30: #{encoder_forward.1} parent=23 // pred_check_branch
          %350 = sbr.rel (%p348) target = $region32
        $region31: #{encoder_forward.1} parent=23 // pred_region
          %s351 = sand.u32 %s88, 1
          %s352 = scalar_lea.sflag [#allocation6], %s351
          %s353 = sand.u32 %s88, 1
          %s354 = smul.addr %s353, 16
          %s355 = scalar_lea.vmem [#allocation5], %s354
          %357 = vsyncadd %s352, 0
          %s358 = smul.addr %s35, 4
          %s359 = smul.addr %s358, 4
          %s360 = scalar_lea.hbm %s1, %s359
          %s361 = sshll.u32 %s360, 4
          %s362 = int_to_ptr.hbm [resolvable:$true] %s361
          %s363 = sshll.u32 %s355, 4
          %s364 = int_to_ptr.vmem [resolvable:$true] %s363
          %369 = dma.hbm_to_vmem [thread:$0]  %s362, 256, %s364, %s352, 64, 64, 4
        $region32: #{encoder_forward.1} parent=23 // pred_fallthru
          _
        // Predicated region
        $region33: #{encoder_forward.1} parent=23 // pred_check
          %p370 = pneg %p124
        $region34: #{encoder_forward.1} parent=23 // pred_check_branch
          %372 = sbr.rel (%p370) target = $region36
        $region35: #{encoder_forward.1} parent=23 // pred_region
          %s373 = sand.u32 %s27, 1
          %s374 = scalar_lea.sflag [#allocation9], %s373
          %s375 = sand.u32 %s114, 1
          %s376 = smul.addr %s375, 32
          %s377 = scalar_lea.vmem [#allocation8], %s376
          %379 = vsyncadd %s374, 0
          %s380 = smul.addr %s35, 8
          %s381 = smul.addr %s380, 4
          %s382 = scalar_lea.hbm %s2, %s381
          %s383 = sshll.u32 %s382, 4
          %s384 = int_to_ptr.hbm [resolvable:$true] %s383
          %s385 = sshll.u32 %s377, 4
          %s386 = int_to_ptr.vmem [resolvable:$true] %s385
          %391 = dma.hbm_to_vmem [thread:$0]  %s384, 512, %s386, %s374, 64, 64, 4
        $region36: #{encoder_forward.1} parent=23 // pred_fallthru
          _
        // Predicated region
        $region37: #{encoder_forward.1} parent=23 // pred_check
          %p392 = pneg %p150
        $region38: #{encoder_forward.1} parent=23 // pred_check_branch
          %394 = sbr.rel (%p392) target = $region40
        $region39: #{encoder_forward.1} parent=23 // pred_region
          %p395 = scmp.lt.s32.totalorder %s35, 1
          %s396 = scalar_select %p395, %s35, 1
          %s397 = smul.addr %s396, 16
          %s398 = smul.addr %s397, 4
          %s399 = scalar_lea.vmem %s3, %s398
        $region40: #{encoder_forward.1} parent=23 // pred_fallthru
          _
        // Predicated region
        $region41: #{encoder_forward.1} parent=23 // pred_check
          %p400 = pneg %p176
        $region42: #{encoder_forward.1} parent=23 // pred_check_branch
          %402 = sbr.rel (%p400) target = $region44
        $region43: #{encoder_forward.1} parent=23 // pred_region
          %p403 = scmp.lt.s32.totalorder %s35, 1
          %s404 = scalar_select %p403, %s35, 1
          %s405 = smul.addr %s404, 8
          %s406 = smul.addr %s405, 4
          %s407 = scalar_lea.vmem %s4, %s406
        $region44: #{encoder_forward.1} parent=23 // pred_fallthru
          _
        // Predicated region
        $region45: #{encoder_forward.1} parent=23 // pred_check
          %p408 = pneg %p202
        $region46: #{encoder_forward.1} parent=23 // pred_check_branch
          %410 = sbr.rel (%p408) target = $region48
        $region47: #{encoder_forward.1} parent=23 // pred_region
          %s411 = sand.u32 %s27, 1
          %s412 = scalar_lea.sflag [#allocation9], %s411
          %s413 = sand.u32 %s192, 1
          %s414 = smul.addr %s413, 8
          %s415 = scalar_lea.vmem [#allocation10], %s414
          %417 = vsyncadd %s412, 0
          %s418 = smul.addr %s35, 8
          %s419 = scalar_lea.hbm %s5, %s418
          %s421 = sshll.u32 %s419, 4
          %s422 = int_to_ptr.hbm [resolvable:$true] %s421
          %s423 = sshll.u32 %s415, 4
          %s424 = int_to_ptr.vmem [resolvable:$true] %s423
          %426 = dma.hbm_to_vmem [thread:$0]  %s422, 128, %s424, %s412
        $region48: #{encoder_forward.1} parent=23 // pred_fallthru
          _
        // Predicated region
        $region49: #{encoder_forward.1} parent=23 // pred_check
          %p427 = pneg %p228
        $region50: #{encoder_forward.1} parent=23 // pred_check_branch
          %429 = sbr.rel (%p427) target = $region52
        $region51: #{encoder_forward.1} parent=23 // pred_region
          %s430 = sand.u32 %s218, 1
          %s431 = scalar_lea.sflag [#allocation12], %s430
          %s432 = sand.u32 %s218, 1
          %s433 = smul.addr %s432, 8
          %s434 = scalar_lea.vmem [#allocation11], %s433
          %436 = vsyncadd %s431, 0
          %s437 = smul.addr %s35, 8
          %s438 = scalar_lea.hbm %s6, %s437
          %s440 = sshll.u32 %s438, 4
          %s441 = int_to_ptr.hbm [resolvable:$true] %s440
          %s442 = sshll.u32 %s434, 4
          %s443 = int_to_ptr.vmem [resolvable:$true] %s442
          %445 = dma.hbm_to_vmem [thread:$0]  %s441, 128, %s443, %s431
        $region52: #{encoder_forward.1} parent=23 // pred_fallthru
          _
      $region24: #{encoder_forward.1} parent=5 // pred_fallthru
        _
      %p446 = scmp.le.s32.totalorder 1, %s27
      %p447 = scmp.lt.s32.totalorder %s27, 9
      %p448 = pnand %p446, %p447
      %p449 = pneg %p448
      // Predicated region
      $region53: #{encoder_forward.1} parent=5 // pred_check
        _
      $region54: #{encoder_forward.1} parent=5 // pred_check_branch
        %451 = sbr.rel (%p448) target = $region56
      $region55: #{encoder_forward.1} parent=5 // pred_region
        %s452 = ssub.s32 %s27, 1
        %s453 = sand.u32 %s91, 1
        %s454 = scalar_lea.sflag [#allocation6], %s453
        %s455 = sand.u32 %s91, 1
        %s456 = smul.addr %s455, 16
        %s457 = scalar_lea.vmem [#allocation5], %s456
        // Predicated region
        $region57: #{encoder_forward.1} parent=55 // pred_check
          %p458 = pneg %p104
        $region58: #{encoder_forward.1} parent=55 // pred_check_branch
          %460 = sbr.rel (%p458) target = $region60
        $region59: #{encoder_forward.1} parent=55 // pred_region
          %462 = dma.done %s454, 256
        $region60: #{encoder_forward.1} parent=55 // pred_fallthru
          _
        %s463 = sand.u32 %s32, 1
        %s464 = scalar_lea.sflag [#allocation9], %s463
        %s465 = sand.u32 %s117, 1
        %s466 = smul.addr %s465, 32
        %s467 = scalar_lea.vmem [#allocation8], %s466
        // Predicated region
        $region61: #{encoder_forward.1} parent=55 // pred_check
          %p468 = pneg %p130
        $region62: #{encoder_forward.1} parent=55 // pred_check_branch
          %470 = sbr.rel (%p468) target = $region64
        $region63: #{encoder_forward.1} parent=55 // pred_region
          %472 = dma.done %s464, 512
        $region64: #{encoder_forward.1} parent=55 // pred_fallthru
          _
        %s473 = sand.u32 %s32, 1
        %s474 = scalar_lea.sflag [#allocation9], %s473
        %s475 = sand.u32 %s195, 1
        %s476 = smul.addr %s475, 8
        %s477 = scalar_lea.vmem [#allocation10], %s476
        // Predicated region
        $region65: #{encoder_forward.1} parent=55 // pred_check
          %p478 = pneg %p208
        $region66: #{encoder_forward.1} parent=55 // pred_check_branch
          %480 = sbr.rel (%p478) target = $region68
        $region67: #{encoder_forward.1} parent=55 // pred_region
          %482 = dma.done %s474, 128
        $region68: #{encoder_forward.1} parent=55 // pred_fallthru
          _
        %s483 = sand.u32 %s221, 1
        %s484 = scalar_lea.sflag [#allocation12], %s483
        %s485 = sand.u32 %s221, 1
        %s486 = smul.addr %s485, 8
        %s487 = scalar_lea.vmem [#allocation11], %s486
        // Predicated region
        $region69: #{encoder_forward.1} parent=55 // pred_check
          %p488 = pneg %p234
        $region70: #{encoder_forward.1} parent=55 // pred_check_branch
          %490 = sbr.rel (%p488) target = $region72
        $region71: #{encoder_forward.1} parent=55 // pred_region
          %492 = dma.done %s484, 128
        $region72: #{encoder_forward.1} parent=55 // pred_fallthru
          _
        %p493 = scmp.eq.s32.totalorder %s38, 0
        %s494 = scalar_select %p493, %s39, 1
        %p495 = scmp.lt.s32.totalorder %s37, 1
        %s496 = scalar_select %p495, %s37, 1
        %p497 = scmp.lt.s32.totalorder %s494, 1
        %s498 = scalar_select %p497, %s494, 1
        %s499 = smul.addr %s496, 2
        %s500 = sadd.s32 %s498, %s499
        %s501 = smul.addr %s500, 8
        %s502 = scalar_lea.vmem %s0, %s501
        %p503 = pneg %p78
        %p504 = pneg %p75
        %s505 = sand.u32 %s91, 1
        %s506 = scalar_lea.sflag [#allocation6], %s505
        %s507 = sand.u32 %s91, 1
        %s508 = smul.addr %s507, 16
        %s509 = scalar_lea.vmem [#allocation5], %s508
        %p510 = pneg %p104
        %p511 = pneg %p101
        %s512 = sand.u32 %s32, 1
        %s513 = scalar_lea.sflag [#allocation9], %s512
        %s514 = sand.u32 %s117, 1
        %s515 = smul.addr %s514, 32
        %s516 = scalar_lea.vmem [#allocation8], %s515
        %p517 = pneg %p130
        %p518 = pneg %p127
        %p519 = scmp.lt.s32.totalorder %s38, 1
        %s520 = scalar_select %p519, %s38, 1
        %s521 = smul.addr %s520, 16
        %s522 = smul.addr %s521, 4
        %s523 = scalar_lea.vmem %s3, %s522
        %p524 = pneg %p156
        %p525 = pneg %p153
        %p526 = scmp.lt.s32.totalorder %s38, 1
        %s527 = scalar_select %p526, %s38, 1
        %s528 = smul.addr %s527, 8
        %s529 = smul.addr %s528, 4
        %s530 = scalar_lea.vmem %s4, %s529
        %p531 = pneg %p182
        %p532 = pneg %p179
        %s533 = sand.u32 %s32, 1
        %s534 = scalar_lea.sflag [#allocation9], %s533
        %s535 = sand.u32 %s195, 1
        %s536 = smul.addr %s535, 8
        %s537 = scalar_lea.vmem [#allocation10], %s536
        %p538 = pneg %p208
        %p539 = pneg %p205
        %s540 = sand.u32 %s221, 1
        %s541 = scalar_lea.sflag [#allocation12], %s540
        %s542 = sand.u32 %s221, 1
        %s543 = smul.addr %s542, 8
        %s544 = scalar_lea.vmem [#allocation11], %s543
        %p545 = pneg %p234
        %p546 = pneg %p231
        %p547 = pneg %p255
        %p548 = pneg %p252
        %p549 = pneg %p276
        %p550 = pneg %p273
        %p551 = pneg %p308
        %p552 = pneg %p305
        %s553 = sand.u32 %s295, 1
        %s554 = scalar_lea.sflag [#allocation7], %s553
        %s555 = sand.u32 %s295, 1
        %s556 = smul.addr %s555, 8
        %s557 = scalar_lea.vmem [#allocation13], %s556
        %p558 = scmp.eq.s32.totalorder %s38, 0
        %s559 = scalar_select %p558, %s39, 1
        %p560 = scmp.lt.s32.totalorder %s37, 1
        %s561 = scalar_select %p560, %s37, 1
        %p562 = scmp.lt.s32.totalorder %s559, 1
        %s563 = scalar_select %p562, %s559, 1
        %s564 = smul.addr %s561, 2
        %s565 = sadd.s32 %s563, %s564
        %s566 = smul.addr %s565, 8
        %s567 = scalar_lea.vmem %s0, %s566
        %p568 = scmp.eq.s32.totalorder %s38, 0
        %s569 = scalar_select %p568, %s39, 1
        %p570 = scmp.lt.s32.totalorder %s38, 1
        %s571 = scalar_select %p570, %s38, 1
        %s572 = smul.addr %s571, 16
        %s573 = smul.addr %s572, 4
        %s574 = scalar_lea.vmem %s3, %s573
        %p575 = scmp.lt.s32.totalorder %s38, 1
        %s576 = scalar_select %p575, %s38, 1
        %s577 = smul.addr %s576, 8
        %s578 = smul.addr %s577, 4
        %s579 = scalar_lea.vmem %s4, %s578
        %p580 = scmp.eq.s32.totalorder %s38, 1
        %s581 = scalar_select %p580, %s39, 0
        %s583 = smul.u32 %s39, 8
        %p584 = scmp.eq.s32.totalorder %s38, 0
        // Predicated region
        $region73: #{encoder_forward.1} parent=55 // pred_check
          %p585 = pneg %p584
        $region74: #{encoder_forward.1} parent=55 // pred_check_branch
          %587 = sbr.rel (%p585) target = $region76
        $region75: #{encoder_forward.1} parent=55 // pred_region
          %v588 = vld [vmem:[%s567] sm:$0xff]
          %s589 = scalar_lea.vmem [#allocation2], %s583
          %vm590 = vcmask 261120
          %591 = vst.msk [vmem:[%s589] sm:$0xff] %vm590, %v588
        $region76: #{encoder_forward.1} parent=55 // pred_fallthru
          _
        %p592 = scmp.eq.s32.totalorder %s39, 0
        // Predicated region
        $region77: #{encoder_forward.1} parent=55 // pred_check
          %p593 = pneg %p592
        $region78: #{encoder_forward.1} parent=55 // pred_check_branch
          %595 = sbr.rel (%p593) target = $region80
        $region79: #{encoder_forward.1} parent=55 // pred_region
          %596 = vst [vmem:[#allocation3] sm:$0x1] 0.0
          %vm597 = vcmask 523264
          %598 = vst.msk [vmem:[#allocation4] sm:$0xff] %vm597, 0.0
        $region80: #{encoder_forward.1} parent=55 // pred_fallthru
          _
        %s599 = scalar_lea.vmem [#allocation2], %s583
        %v600 = vld [vmem:[%s599] sm:$0xff]
        %v601 = vpack.c.bf16 %v600, %v600
        %v602 = vld [vmem:[%s457] sm:$0xf]
        %v603 = vld [vmem:[%s457 + $0x4] sm:$0xf]
        %v604 = vld [vmem:[%s457 + $0x8] sm:$0xf]
        %v605 = vld [vmem:[%s457 + $0xc] sm:$0xf]
        %v610 = vunpack.c.l.b16 %v602
        %v611 = vunpack.c.l.b16 %v603
        %v612 = vunpack.c.l.b16 %v604
        %v613 = vunpack.c.l.b16 %v605
        %v614 = vpack.c.b16 %v611, %v610
        %v615 = vpack.c.b16 %v613, %v612
        %vm618 = vcmask 261120
        %v620 = vsel %vm618, %v601, 0
        %622 = vmatpush.bf16.msra.mxu0 0
        %623 = vmatpush.bf16.msra.mxu0 0
        %624 = vmatpush.bf16.msra.mxu0 0
        %625 = vmatpush.bf16.msra.mxu0 0
        %626 = vmatpush.bf16.msra.mxu0 0
        %627 = vmatpush.bf16.msra.mxu0 0
        %628 = vmatpush.bf16.msra.mxu0 %v615
        %629 = vmatpush.bf16.msra.mxu0 %v614
        %630 = vmatmul.bf16.gmra.mxu0 %v620
        %v631 = vpop.f32.mrf.mxu0
        %v632 = vadd.f32 0.0, %v631
        %v633 = vpop.f32.mrf.mxu0
        %634 = vdwg.mxu0
        %vm635 = vcmask 523264
        %636 = vst.msk [vmem:[#allocation4 + $0x8] sm:$0xff] %vm635, %v632
        %v637 = vld [vmem:[%s477] sm:$0xff]
        %v638 = vld [vmem:[#allocation4 + $0x5] sm:$0xff]
        %v639 = vperm.slane %v637, 0
        %v640 = vmul.f32 %v639, %v638
        %v641 = vperm.slane %v637, 4
        %v642 = vadd.f32 %v641, %v640
        %v643 = vld [vmem:[#allocation4 + $0x6] sm:$0xff]
        %v644 = vperm.slane %v637, 1
        %v645 = vmul.f32 %v644, %v643
        %v646 = vadd.f32 %v642, %v645
        %v647 = vld [vmem:[#allocation4 + $0x7] sm:$0xff]
        %v648 = vperm.slane %v637, 2
        %v649 = vmul.f32 %v648, %v647
        %v650 = vadd.f32 %v646, %v649
        %v651 = vperm.slane %v637, 3
        %v652 = vmul.f32 %v651, %v632
        %v653 = vadd.f32 %v650, %v652
        %v654 = vld [vmem:[#allocation4 + $0x8] sm:$0xff]
        %655 = vst.msk [vmem:[#allocation4] sm:$0xff] %vm635, %v654
        %v656 = vxor.u32 %v653, 2147483648
        %v657 = vmul.f32 %v656, 1.442695
        %v658 = vpow.pop %v657
        %v659 = vadd.f32 %v658, 1.0
        %v660 = vrcp.pop %v659
        %v661 = vmul.f32 %v659, %v660
        %v662 = vsub.f32 1.0, %v661
        %v663 = vmul.f32 %v660, %v662
        %v664 = vadd.f32 %v660, %v663
        %vm665 = vweird.f32 %v659
        %vm666 = vweird.f32 %v660
        %vm667 = vmor %vm665, %vm666
        %v668 = vsel %vm667, %v660, %v664
        %v669 = vand.u32 2147483647, %v659
        %vm670 = vcmp.eq.f32.partialorder %v669, 8.507059e+37
        %v671 = vand.u32 %v659, 2147483648
        %v672 = vor.u32 1.1754944e-38, %v671
        %v673 = vsel %vm670, %v672, %v668
        %v674 = vmul.f32 1.0, %v673
        %v675 = vmul.f32 %v653, %v674
        %v676 = vxor.u32 %v632, 2147483648
        %v677 = vmul.f32 %v676, 1.442695
        %v678 = vpow.pop %v677
        %v679 = vadd.f32 %v678, 1.0
        %v680 = vrcp.pop %v679
        %v681 = vmul.f32 %v679, %v680
        %v682 = vsub.f32 1.0, %v681
        %v683 = vmul.f32 %v680, %v682
        %v684 = vadd.f32 %v680, %v683
        %vm685 = vweird.f32 %v679
        %vm686 = vweird.f32 %v680
        %vm687 = vmor %vm685, %vm686
        %v688 = vsel %vm687, %v680, %v684
        %v689 = vand.u32 2147483647, %v679
        %vm690 = vcmp.eq.f32.partialorder %v689, 8.507059e+37
        %v691 = vand.u32 %v679, 2147483648
        %v692 = vor.u32 1.1754944e-38, %v691
        %v693 = vsel %vm690, %v692, %v688
        %v694 = vmul.f32 1.0, %v693
        %v695 = vmul.f32 %v632, %v694
        %v696 = vpack.c.bf16 %v675, %v675
        %v697 = vld [vmem:[%s467] sm:$0xf]
        %v698 = vld [vmem:[%s467 + $0x4] sm:$0xf]
        %v699 = vld [vmem:[%s467 + $0x8] sm:$0xf]
        %v700 = vld [vmem:[%s467 + $0xc] sm:$0xf]
        %v701 = vld [vmem:[%s467 + $0x10] sm:$0xf]
        %v702 = vld [vmem:[%s467 + $0x14] sm:$0xf]
        %v703 = vld [vmem:[%s467 + $0x18] sm:$0xf]
        %v704 = vld [vmem:[%s467 + $0x1c] sm:$0xf]
        %v713 = vunpack.c.l.b16 %v697
        %v714 = vunpack.c.l.b16 %v698
        %v715 = vunpack.c.l.b16 %v699
        %v716 = vunpack.c.l.b16 %v700
        %v717 = vunpack.c.l.b16 %v701
        %v718 = vunpack.c.l.b16 %v702
        %v719 = vunpack.c.l.b16 %v703
        %v720 = vunpack.c.l.b16 %v704
        %v721 = vpack.c.b16 %v714, %v713
        %v722 = vpack.c.b16 %v716, %v715
        %v723 = vpack.c.b16 %v718, %v717
        %v724 = vpack.c.b16 %v720, %v719
        %v730 = vsel %vm635, %v696, 0
        %732 = vmatpush.bf16.msra.mxu0 0
        %733 = vmatpush.bf16.msra.mxu0 0
        %734 = vmatpush.bf16.msra.mxu0 0
        %735 = vmatpush.bf16.msra.mxu0 0
        %736 = vmatpush.bf16.msra.mxu0 %v724
        %737 = vmatpush.bf16.msra.mxu0 %v723
        %738 = vmatpush.bf16.msra.mxu0 %v722
        %739 = vmatpush.bf16.msra.mxu0 %v721
        %740 = vmatmul.bf16.gmra.mxu0 %v730
        %v741 = vpop.f32.mrf.mxu0
        %v742 = vadd.f32 0.0, %v741
        %v743 = vpop.f32.mrf.mxu0
        %744 = vdwg.mxu0
        %v745 = vld [vmem:[%s7] sm:$0xf]
        %v746 = vpack.c.bf16 %v742, %v742
        %v747 = vld [vmem:[%s8] sm:$0xff]
        %v748 = vld [vmem:[#allocation3] sm:$0x1]
        %750 = vset.pattern.permute.xlu0 0
        %751 = vperm.xlu0 %750, %v747
        %v752 = vpop.permute.xlu0 %751
        %v755 = vperm.slane %v748, 0
        %v757 = vmul.f32 %v752, %v755
        %vm758 = vcmask 64512
        %v760 = vsel %vm758, %v745, 0
        %vm762 = vcmask 1043456
        %v764 = vsel %vm762, %v746, 0
        %766 = vmatpush.bf16.msra.mxu0 0
        %767 = vmatpush.bf16.msra.mxu0 0
        %768 = vmatpush.bf16.msra.mxu0 0
        %769 = vmatpush.bf16.msra.mxu0 0
        %770 = vmatpush.bf16.msra.mxu0 0
        %771 = vmatpush.bf16.msra.mxu0 0
        %772 = vmatpush.bf16.msra.mxu0 0
        %773 = vmatpush.bf16.msra.mxu0 %v764
        %774 = vmatmul.bf16.gmra.mxu0 %v760
        %v775 = vpop.f32.mrf.mxu0
        %v776 = vadd.f32 %v757, %v775
        %v777 = vpop.f32.mrf.mxu0
        %778 = vdwg.mxu0
        %779 = vst [vmem:[#allocation3 - $0x7] sm:$0x80] %v776
        %v780 = vpack.c.bf16 %v776, %v776
        %v781 = vld [vmem:[%s574] sm:$0xf]
        %v782 = vld [vmem:[%s574 + $0x4] sm:$0xf]
        %v783 = vld [vmem:[%s574 + $0x8] sm:$0xf]
        %v784 = vld [vmem:[%s574 + $0xc] sm:$0xf]
        %v785 = vld [vmem:[%s574 + $0x10] sm:$0xf]
        %v786 = vld [vmem:[%s574 + $0x14] sm:$0xf]
        %v787 = vld [vmem:[%s574 + $0x18] sm:$0xf]
        %v788 = vld [vmem:[%s574 + $0x1c] sm:$0xf]
        %v789 = vld [vmem:[%s574 + $0x20] sm:$0xf]
        %v790 = vld [vmem:[%s574 + $0x24] sm:$0xf]
        %v791 = vld [vmem:[%s574 + $0x28] sm:$0xf]
        %v792 = vld [vmem:[%s574 + $0x2c] sm:$0xf]
        %v793 = vld [vmem:[%s574 + $0x30] sm:$0xf]
        %v794 = vld [vmem:[%s574 + $0x34] sm:$0xf]
        %v795 = vld [vmem:[%s574 + $0x38] sm:$0xf]
        %v796 = vld [vmem:[%s574 + $0x3c] sm:$0xf]
        %v797 = vperm.slane %v637, 5
        %v798 = vmul.f32 %v797, %v675
        %v815 = vunpack.c.l.b16 %v781
        %v816 = vunpack.c.l.b16 %v782
        %v817 = vunpack.c.l.b16 %v783
        %v818 = vunpack.c.l.b16 %v784
        %v819 = vunpack.c.l.b16 %v785
        %v820 = vunpack.c.l.b16 %v786
        %v821 = vunpack.c.l.b16 %v787
        %v822 = vunpack.c.l.b16 %v788
        %v823 = vunpack.c.l.b16 %v789
        %v824 = vunpack.c.l.b16 %v790
        %v825 = vunpack.c.l.b16 %v791
        %v826 = vunpack.c.l.b16 %v792
        %v827 = vunpack.c.l.b16 %v793
        %v828 = vunpack.c.l.b16 %v794
        %v829 = vunpack.c.l.b16 %v795
        %v830 = vunpack.c.l.b16 %v796
        %v831 = vpack.c.b16 %v816, %v815
        %v832 = vpack.c.b16 %v818, %v817
        %v833 = vpack.c.b16 %v820, %v819
        %v834 = vpack.c.b16 %v822, %v821
        %v835 = vpack.c.b16 %v824, %v823
        %v836 = vpack.c.b16 %v826, %v825
        %v837 = vpack.c.b16 %v828, %v827
        %v838 = vpack.c.b16 %v830, %v829
        %847 = vmatpush.bf16.msra.mxu0 %v838
        %848 = vmatpush.bf16.msra.mxu0 %v837
        %849 = vmatpush.bf16.msra.mxu0 %v836
        %850 = vmatpush.bf16.msra.mxu0 %v835
        %851 = vmatpush.bf16.msra.mxu0 %v834
        %852 = vmatpush.bf16.msra.mxu0 %v833
        %853 = vmatpush.bf16.msra.mxu0 %v832
        %854 = vmatpush.bf16.msra.mxu0 %v831
        %855 = vmatmul.bf16.gmra.mxu0 %v780
        %v856 = vpop.f32.mrf.mxu0
        %v857 = vadd.f32 %v798, %v856
        %v858 = vpop.f32.mrf.mxu0
        %859 = vdwg.mxu0
        %861 = vrot.lane.b32.xlu0 %v695, 64
        %v862 = vpop.permute.xlu0 %861
        %v864 = vmul.f32 %v857, %v862
        %v865 = vpack.c.bf16 %v864, %v864
        %v866 = vld [vmem:[%s579] sm:$0xf]
        %v867 = vld [vmem:[%s579 + $0x4] sm:$0xf]
        %v868 = vld [vmem:[%s579 + $0x8] sm:$0xf]
        %v869 = vld [vmem:[%s579 + $0xc] sm:$0xf]
        %v870 = vld [vmem:[%s579 + $0x10] sm:$0xf]
        %v871 = vld [vmem:[%s579 + $0x14] sm:$0xf]
        %v872 = vld [vmem:[%s579 + $0x18] sm:$0xf]
        %v873 = vld [vmem:[%s579 + $0x1c] sm:$0xf]
        %v882 = vunpack.c.l.b16 %v866
        %v883 = vunpack.c.l.b16 %v867
        %v884 = vunpack.c.l.b16 %v868
        %v885 = vunpack.c.l.b16 %v869
        %v886 = vunpack.c.l.b16 %v870
        %v887 = vunpack.c.l.b16 %v871
        %v888 = vunpack.c.l.b16 %v872
        %v889 = vunpack.c.l.b16 %v873
        %v890 = vpack.c.b16 %v883, %v882
        %v891 = vpack.c.b16 %v885, %v884
        %v892 = vpack.c.b16 %v887, %v886
        %v893 = vpack.c.b16 %v889, %v888
        %v899 = vsel %vm635, %v865, 0
        %901 = vmatpush.bf16.msra.mxu0 0
        %902 = vmatpush.bf16.msra.mxu0 0
        %903 = vmatpush.bf16.msra.mxu0 0
        %904 = vmatpush.bf16.msra.mxu0 0
        %905 = vmatpush.bf16.msra.mxu0 %v893
        %906 = vmatpush.bf16.msra.mxu0 %v892
        %907 = vmatpush.bf16.msra.mxu0 %v891
        %908 = vmatpush.bf16.msra.mxu0 %v890
        %909 = vmatmul.bf16.gmra.mxu0 %v899
        %v910 = vpop.f32.mrf.mxu0
        %v911 = vadd.f32 %v600, %v910
        %v912 = vpop.f32.mrf.mxu0
        %913 = vdwg.mxu0
        %v914 = vsel %vm618, %v911, 0.0
        %915 = vadd.xlane.f32.xlu0 %v914
        %v916 = vpop.xlane.xlu0 %915
        %v917 = vrcp.pop 32.0
        %v918 = vmul.f32 32.0, %v917
        %v919 = vsub.f32 1.0, %v918
        %v920 = vmul.f32 %v917, %v919
        %v921 = vadd.f32 %v917, %v920
        %vm922 = vweird.f32 %v917
        %v923 = vsel %vm922, %v917, %v921
        %v924 = vmul.f32 %v916, %v923
        %v925 = vsub.f32 %v911, %v924
        %v926 = vmul.f32 %v925, %v925
        %v927 = vsel %vm618, %v926, 0.0
        %928 = vadd.xlane.f32.xlu0 %v927
        %v929 = vpop.xlane.xlu0 %928
        %v930 = vmul.f32 %v929, %v923
        %v931 = vld [vmem:[%s487] sm:$0xff]
        %v932 = vadd.f32 %v930, 1e-05
        %v933 = vrsqrt.pop %v932
        %v934 = vmul.f32 %v933, %v932
        %v935 = vmul.f32 %v934, %v933
        %v936 = vmul.f32 0.5, %v935
        %v937 = vsub.f32 1.5, %v936
        %v938 = vmul.f32 %v933, %v937
        %vm939 = vweird.f32 %v932
        %vm940 = vweird.f32 %v933
        %vm941 = vmor %vm939, %vm940
        %v942 = vsel %vm941, %v933, %v938
        %v943 = vmul.f32 %v925, %v942
        %v944 = vperm.slane %v931, 0
        %v945 = vmul.f32 %v943, %v944
        %v946 = vperm.slane %v931, 1
        %v947 = vadd.f32 %v945, %v946
        %p948 = scmp.lt.s32.totalorder %s38, 1
        // Predicated region
        $region81: #{encoder_forward.1} parent=55 // pred_check
          %p949 = pneg %p948
        $region82: #{encoder_forward.1} parent=55 // pred_check_branch
          %951 = sbr.rel (%p949) target = $region84
        $region83: #{encoder_forward.1} parent=55 // pred_region
          %952 = vst.msk [vmem:[%s599] sm:$0xff] %vm618, %v947
        $region84: #{encoder_forward.1} parent=55 // pred_fallthru
          _
        %p953 = scmp.eq.s32.totalorder %s38, 1
        // Predicated region
        $region85: #{encoder_forward.1} parent=55 // pred_check
          %p954 = pneg %p953
        $region86: #{encoder_forward.1} parent=55 // pred_check_branch
          %956 = sbr.rel (%p954) target = $region88
        $region87: #{encoder_forward.1} parent=55 // pred_region
          %957 = vst.msk [vmem:[%s557] sm:$0xff] %vm618, %v947
        $region88: #{encoder_forward.1} parent=55 // pred_fallthru
          _
        %s958 = sand.u32 %s295, 1
        %s959 = scalar_lea.sflag [#allocation7], %s958
        %s960 = sand.u32 %s295, 1
        %s961 = smul.addr %s960, 8
        %s962 = scalar_lea.vmem [#allocation13], %s961
        // Predicated region
        $region89: #{encoder_forward.1} parent=55 // pred_check
          %p963 = pneg %p305
        $region90: #{encoder_forward.1} parent=55 // pred_check_branch
          %965 = sbr.rel (%p963) target = $region92
        $region91: #{encoder_forward.1} parent=55 // pred_region
          %p966 = scmp.eq.s32.totalorder %s38, 1
          %s967 = scalar_select %p966, %s39, 0
          %969 = vsyncadd %s959, 0
          %s970 = smul.addr %s37, 2
          %s971 = sadd.s32 %s967, %s970
          %s972 = smul.addr %s971, 8
          %s973 = scalar_lea.hbm %s9, %s972
          %s975 = sshll.u32 %s962, 4
          %s976 = int_to_ptr.vmem [resolvable:$true] %s975
          %s977 = sshll.u32 %s973, 4
          %s978 = int_to_ptr.hbm [resolvable:$true] %s977
          %980 = dma.vmem_to_hbm [thread:$0]  %s976, 128, %s978, %s959
        $region92: #{encoder_forward.1} parent=55 // pred_fallthru
          _
      $region56: #{encoder_forward.1} parent=5 // pred_fallthru
        _
      %p981 = scmp.le.s32.totalorder 2, %s27
      // Predicated region
      $region93: #{encoder_forward.1} parent=5 // pred_check
        %p982 = pneg %p981
      $region94: #{encoder_forward.1} parent=5 // pred_check_branch
        %984 = sbr.rel (%p982) target = $region96
      $region95: #{encoder_forward.1} parent=5 // pred_region
        %s985 = ssub.s32 %s27, 2
        // Predicated region
        $region97: #{encoder_forward.1} parent=95 // pred_check
          %p986 = pneg %p311
        $region98: #{encoder_forward.1} parent=95 // pred_check_branch
          %988 = sbr.rel (%p986) target = $region100
        $region99: #{encoder_forward.1} parent=95 // pred_region
          %s989 = sand.u32 %s296, 1
          %s990 = scalar_lea.sflag [#allocation7], %s989
          %s991 = sand.u32 %s296, 1
          %s992 = smul.addr %s991, 8
          %s993 = scalar_lea.vmem [#allocation13], %s992
          %995 = dma.done %s990, 128
        $region100: #{encoder_forward.1} parent=95 // pred_fallthru
          _
      $region96: #{encoder_forward.1} parent=5 // pred_fallthru
        _
    $region6: #{encoder_forward.1} parent=1 // loop_footer
      %s31 = sadd.s32 1, %s27
    $region7: #{encoder_forward.1} parent=1 // loop_footer_branch
      %26 = sbr.rel target = $region3
    $region8: #{encoder_forward.1} parent=1 // loop_exit
      _
    %996 = vsyncpa [#allocation6], 1
    %s997 = scalar_lea.sflag [#allocation6], 1
    %998 = vsyncpa %s997, 1
    %999 = vsyncpa [#allocation9], 1
    %s1000 = scalar_lea.sflag [#allocation9], 1
    %1001 = vsyncpa %s1000, 1
    %1002 = vsyncpa [#allocation12], 1
    %s1003 = scalar_lea.sflag [#allocation12], 1
    %1004 = vsyncpa %s1003, 1
    %1005 = vsyncpa [#allocation7], 1
    %s1006 = scalar_lea.sflag [#allocation7], 1
    %1007 = vsyncpa %s1006, 1

</llo_original>
